<compile_context>
chip_gen: v7x
topology: tpu7x:2x2x1
jax: 0.10.0
libtpu: 0.0.40
codegen_flags: <defaults>
</compile_context>

<pallas_src>
import numpy as np
import jax
import jax.numpy as jnp
from jax.experimental import pallas as pl
from jax.experimental.pallas import tpu as pltpu

NEG_SLOPE = 0.2  # nn.LeakyReLU(0.2)


def _round_up(v, m):
    return ((v + m - 1) // m) * m


def _make_kernel(Bb, c_in, c_out, c_pad, K, P, L, Lp, has_proj, slope):
    def lrelu(v):
        return jnp.maximum(v, slope * v)

    def kernel(*refs):
        x_ref = refs[0]
        w1_ref, b1_ref, w2_ref, b2_ref = refs[1:5]
        idx = 5
        if has_proj:
            wp_ref, bp_ref = refs[idx], refs[idx + 1]
            idx += 2
        o_ref = refs[idx]
        xpad_sc = refs[idx + 1]   # (c_pad, Lp + 2P): resident zero-padded signal
        rhs_sc = refs[idx + 2]    # (K*c_pad, Lp)   : stacked-shift matmul RHS

        # Zero the scratches once per invocation: pad columns must read as
        # zeros, and the unused (zero-weight) channel rows must hold finite
        # values so they contribute exactly 0 to the fused matmul.
        xpad_sc[...] = jnp.zeros_like(xpad_sc)
        rhs_sc[...] = jnp.zeros_like(rhs_sc)

        # Lane-validity mask, hoisted out of the batch loop.
        if Lp != L:
            valid = jax.lax.broadcasted_iota(jnp.int32, (c_out, Lp), 1) < L
        else:
            valid = None

        def conv_fused(y, ci, w_ref, b_ref):
            # y: (ci, Lp) f32  ->  (c_out, Lp) f32 ; single MXU matmul per conv.
            xpad_sc[0:ci, P:P + Lp] = y                       # write center slice
            for k in range(K):                                # stacked-shift taps
                rhs_sc[k * c_pad:k * c_pad + ci, :] = xpad_sc[0:ci, k:k + Lp]
            acc = jnp.dot(w_ref[...], rhs_sc[...].astype(jnp.bfloat16),
                          preferred_element_type=jnp.float32)
            return acc + b_ref[...]

        for b in range(Bb):
            xb = x_ref[b].astype(jnp.float32)                 # (c_in, Lp)
            y = lrelu(conv_fused(xb, c_in, w1_ref, b1_ref))
            if valid is not None:
                # conv2 must see zeros beyond the true length L (zero padding).
                y = jnp.where(valid, y, 0.0)
            y = conv_fused(y, c_out, w2_ref, b2_ref)
            if has_proj:
                y0 = jnp.dot(wp_ref[...], xb.astype(jnp.bfloat16),
                             preferred_element_type=jnp.float32) + bp_ref[...]
            else:
                y0 = xb
            o_ref[b] = lrelu(y0 + y).astype(o_ref.dtype)

    return kernel


def _fuse_conv_weight(w, c_pad):
    """(c_out, ci, K) torch layout -> (c_out, K*c_pad) bf16 (taps major, ci zero-padded)."""
    c_out, ci, K = w.shape
    wt = jnp.transpose(w, (0, 2, 1))                       # (c_out, K, ci)
    wt = jnp.pad(wt, ((0, 0), (0, 0), (0, c_pad - ci)))    # (c_out, K, c_pad)
    return wt.reshape(c_out, K * c_pad).astype(jnp.bfloat16)


def res_block_forward(x, w1, b1, w2, b2, wp=None, bp=None, *, stride=1, padding=1):
    """x: (B, c_in, L); w1: (c_out, c_in, K); w2: (c_out, c_out, K); wp: (c_out, c_in, 1)."""
    B, c_in, L = x.shape
    c_out, _, K = w1.shape
    P = padding
    # TODO(synk): stride != 1 has no residual-consistent semantics in the module
    # (y0 + y would shape-mismatch), so only stride == 1 / "same" convs are handled.
    assert stride == 1, "only stride=1 is supported"
    assert L + 2 * P - K + 1 == L, "residual add requires 'same' convolutions"

    has_proj = c_in != c_out
    if has_proj:
        assert wp is not None and bp is not None

    Lp = _round_up(L, 128)                   # lane-dense length
    c_pad = _round_up(max(c_in, c_out), 8)   # sublane-aligned channel stride
    Bb = 1
    for d in range(min(B, 8), 0, -1):        # batch elements per grid step
        if B % d == 0:
            Bb = d
            break

    x_p = jnp.pad(x, ((0, 0), (0, 0), (0, Lp - L)))

    args = [
        x_p,
        _fuse_conv_weight(w1, c_pad), b1.reshape(c_out, 1).astype(jnp.float32),
        _fuse_conv_weight(w2, c_pad), b2.reshape(c_out, 1).astype(jnp.float32),
    ]
    in_specs = [
        pl.BlockSpec((Bb, c_in, Lp), lambda i: (i, 0, 0)),
        pl.BlockSpec((c_out, K * c_pad), lambda i: (0, 0)),
        pl.BlockSpec((c_out, 1), lambda i: (0, 0)),
        pl.BlockSpec((c_out, K * c_pad), lambda i: (0, 0)),
        pl.BlockSpec((c_out, 1), lambda i: (0, 0)),
    ]
    if has_proj:
        args += [wp.reshape(c_out, c_in).astype(jnp.bfloat16),
                 bp.reshape(c_out, 1).astype(jnp.float32)]
        in_specs += [pl.BlockSpec((c_out, c_in), lambda i: (0, 0)),
                     pl.BlockSpec((c_out, 1), lambda i: (0, 0))]

    kernel = _make_kernel(Bb, c_in, c_out, c_pad, K, P, L, Lp, has_proj, NEG_SLOPE)

    out_p = pl.pallas_call(
        kernel,
        out_shape=jax.ShapeDtypeStruct((B, c_out, Lp), x.dtype),
        grid=(B // Bb,),
        in_specs=in_specs,
        out_specs=pl.BlockSpec((Bb, c_out, Lp), lambda i: (i, 0, 0)),
        scratch_shapes=[
            pltpu.VMEM((c_pad, Lp + 2 * P), jnp.float32),
            pltpu.VMEM((K * c_pad, Lp), jnp.float32),
        ],
        compiler_params=pltpu.CompilerParams(
            dimension_semantics=("parallel",)),
    )(*args)

    return out_p[:, :, :L]


def reference_forward(x, w1, b1, w2, b2, wp, bp, *, padding=1):
    """Pure-JAX reference mirroring the PyTorch ResBlock."""
    def conv(y, w, b):
        out = jax.lax.conv_general_dilated(
            y, w, window_strides=(1,), padding=[(padding, padding)],
            dimension_numbers=("NCH", "OIH", "NCH"))
        return out + b[None, :, None]

    def lrelu(v):
        return jnp.where(v >= 0, v, NEG_SLOPE * v)

    y = lrelu(conv(x, w1, b1))
    y = conv(y, w2, b2)
    if x.shape[1] != w1.shape[0]:
        c_out, c_in = wp.shape[0], wp.shape[1]
        y0 = jnp.einsum("oi,bil->bol", wp.reshape(c_out, c_in), x) + bp[None, :, None]
    else:
        y0 = x
    return lrelu(y0 + y)


if __name__ == "__main__":
    B, Cin, Cout, L = 2, 4, 8, 16
    K, stride, P = 3, 1, 1           # 'same' conv; c_in != c_out -> proj path active

    key = jax.random.PRNGKey(0)
    k1, k2, k3, k4, k5, k6, k7 = jax.random.split(key, 7)
    w1 = 0.1 * jax.random.normal(k1, (Cout, Cin, K), jnp.float32)
    b1 = 0.1 * jax.random.normal(k2, (Cout,), jnp.float32)
    w2 = 0.1 * jax.random.normal(k3, (Cout, Cout, K), jnp.float32)
    b2 = 0.1 * jax.random.normal(k4, (Cout,), jnp.float32)
    wp = 0.1 * jax.random.normal(k5, (Cout, Cin, 1), jnp.float32)
    bp = 0.1 * jax.random.normal(k6, (Cout,), jnp.float32)
    x = jax.random.normal(k7, (B, Cin, L), jnp.float32)

    out = res_block_forward(x, w1, b1, w2, b2, wp, bp, stride=stride, padding=P)
    out = jax.block_until_ready(out)

    ref = reference_forward(x, w1, b1, w2, b2, wp, bp, padding=P)
    np.testing.assert_allclose(np.asarray(out), np.asarray(ref), atol=1e-2, rtol=1e-2)
    print("KERNEL_OK")
</pallas_src>

<mosaic_0001>
module attributes {stable_mosaic.version = 11 : i64} {
  func.func @kernel(%arg0: i32, %arg1: memref<2x4x128xf32, #tpu.memory_space<vmem>>, %arg2: memref<8x24xbf16, #tpu.memory_space<vmem>>, %arg3: memref<8x1xf32, #tpu.memory_space<vmem>>, %arg4: memref<8x24xbf16, #tpu.memory_space<vmem>>, %arg5: memref<8x1xf32, #tpu.memory_space<vmem>>, %arg6: memref<8x4xbf16, #tpu.memory_space<vmem>>, %arg7: memref<8x1xf32, #tpu.memory_space<vmem>>, %arg8: memref<2x8x128xf32, #tpu.memory_space<vmem>>, %arg9: memref<8x130xf32, #tpu.memory_space<vmem>>, %arg10: memref<24x128xf32, #tpu.memory_space<vmem>>) attributes {dimension_semantics = [#tpu.dimension_semantics<parallel>], iteration_bounds = array<i64: 1>, scalar_prefetch = 0 : i64, scratch_operands = 2 : i64, tpu.core_type = #tpu.core_type<tc>, window_params = [{transform_indices = @transform_0, window_bounds = array<i64: 2, 4, 128>}, {pipeline_mode = #tpu.pipeline_mode<synchronous>, transform_indices = @transform_1, window_bounds = array<i64: 8, 24>}, {pipeline_mode = #tpu.pipeline_mode<synchronous>, transform_indices = @transform_2, window_bounds = array<i64: 8, 1>}, {pipeline_mode = #tpu.pipeline_mode<synchronous>, transform_indices = @transform_3, window_bounds = array<i64: 8, 24>}, {pipeline_mode = #tpu.pipeline_mode<synchronous>, transform_indices = @transform_4, window_bounds = array<i64: 8, 1>}, {pipeline_mode = #tpu.pipeline_mode<synchronous>, transform_indices = @transform_5, window_bounds = array<i64: 8, 4>}, {pipeline_mode = #tpu.pipeline_mode<synchronous>, transform_indices = @transform_6, window_bounds = array<i64: 8, 1>}, {transform_indices = @transform_7, window_bounds = array<i64: 2, 8, 128>}]} {
    %cst = arith.constant 0.000000e+00 : f32
    %0 = vector.broadcast %cst : f32 to vector<8x130xf32>
    %c0 = arith.constant 0 : index
    %c0_0 = arith.constant 0 : index
    %1 = vector.load %arg9[%c0, %c0_0] : memref<8x130xf32, #tpu.memory_space<vmem>>, vector<8x130xf32>
    tpu.vector_store %arg9[%c0, %c0_0], %0 {strides = array<i32>} : memref<8x130xf32, #tpu.memory_space<vmem>>, vector<8x130xf32>,
    %cst_1 = arith.constant 0.000000e+00 : f32
    %2 = vector.broadcast %cst_1 : f32 to vector<24x128xf32>
    %c0_2 = arith.constant 0 : index
    %c0_3 = arith.constant 0 : index
    %3 = vector.load %arg10[%c0_2, %c0_3] : memref<24x128xf32, #tpu.memory_space<vmem>>, vector<24x128xf32>
    tpu.vector_store %arg10[%c0_2, %c0_3], %2 {strides = array<i32>} : memref<24x128xf32, #tpu.memory_space<vmem>>, vector<24x128xf32>,
    %4 = tpu.iota {dimensions = array<i32: 1>} : vector<8x128xi32>
    %c16_i32 = arith.constant 16 : i32
    %5 = vector.broadcast %c16_i32 : i32 to vector<8x128xi32>
    %6 = arith.cmpi slt, %4, %5 : vector<8x128xi32>
    %c0_4 = arith.constant 0 : index
    %c0_5 = arith.constant 0 : index
    %c0_6 = arith.constant 0 : index
    %7 = vector.load %arg1[%c0_4, %c0_5, %c0_6] : memref<2x4x128xf32, #tpu.memory_space<vmem>>, vector<1x4x128xf32>
    %8 = vector.shape_cast %7 : vector<1x4x128xf32> to vector<4x128xf32>
    %c0_7 = arith.constant 0 : index
    %c1 = arith.constant 1 : index
    %9 = vector.load %arg9[%c0_7, %c1] : memref<8x130xf32, #tpu.memory_space<vmem>>, vector<4x128xf32>
    tpu.vector_store %arg9[%c0_7, %c1], %8 {strides = array<i32>} : memref<8x130xf32, #tpu.memory_space<vmem>>, vector<4x128xf32>,
    %c0_8 = arith.constant 0 : index
    %c0_9 = arith.constant 0 : index
    %10 = vector.load %arg9[%c0_8, %c0_9] : memref<8x130xf32, #tpu.memory_space<vmem>>, vector<4x128xf32>
    %c0_10 = arith.constant 0 : index
    %c0_11 = arith.constant 0 : index
    %11 = vector.load %arg10[%c0_10, %c0_11] : memref<24x128xf32, #tpu.memory_space<vmem>>, vector<4x128xf32>
    tpu.vector_store %arg10[%c0_10, %c0_11], %10 {strides = array<i32>} : memref<24x128xf32, #tpu.memory_space<vmem>>, vector<4x128xf32>,
    %c0_12 = arith.constant 0 : index
    %c1_13 = arith.constant 1 : index
    %12 = vector.load %arg9[%c0_12, %c1_13] : memref<8x130xf32, #tpu.memory_space<vmem>>, vector<4x128xf32>
    %c8 = arith.constant 8 : index
    %c0_14 = arith.constant 0 : index
    %13 = vector.load %arg10[%c8, %c0_14] : memref<24x128xf32, #tpu.memory_space<vmem>>, vector<4x128xf32>
    tpu.vector_store %arg10[%c8, %c0_14], %12 {strides = array<i32>} : memref<24x128xf32, #tpu.memory_space<vmem>>, vector<4x128xf32>,
    %c0_15 = arith.constant 0 : index
    %c2 = arith.constant 2 : index
    %14 = vector.load %arg9[%c0_15, %c2] : memref<8x130xf32, #tpu.memory_space<vmem>>, vector<4x128xf32>
    %c16 = arith.constant 16 : index
    %c0_16 = arith.constant 0 : index
    %15 = vector.load %arg10[%c16, %c0_16] : memref<24x128xf32, #tpu.memory_space<vmem>>, vector<4x128xf32>
    tpu.vector_store %arg10[%c16, %c0_16], %14 {strides = array<i32>} : memref<24x128xf32, #tpu.memory_space<vmem>>, vector<4x128xf32>,
    %c0_17 = arith.constant 0 : index
    %c0_18 = arith.constant 0 : index
    %16 = vector.load %arg2[%c0_17, %c0_18] : memref<8x24xbf16, #tpu.memory_space<vmem>>, vector<8x24xbf16>
    %c0_19 = arith.constant 0 : index
    %c0_20 = arith.constant 0 : index
    %17 = vector.load %arg10[%c0_19, %c0_20] : memref<24x128xf32, #tpu.memory_space<vmem>>, vector<24x128xf32>
    %18 = arith.truncf %17 : vector<24x128xf32> to vector<24x128xbf16>
    %cst_21 = arith.constant dense<0.000000e+00> : vector<8x128xf32>
    %19 = tpu.matmul %16, %18, %cst_21 {dimension_numbers = #tpu.dot_dimension_numbers<[1], [0], [0], [1], [0, 0, 1, 1], [], []>} : vector<8x24xbf16>, vector<24x128xbf16>, vector<8x128xf32> -> vector<8x128xf32>
    %c0_22 = arith.constant 0 : index
    %c0_23 = arith.constant 0 : index
    %20 = vector.load %arg3[%c0_22, %c0_23] : memref<8x1xf32, #tpu.memory_space<vmem>>, vector<8x1xf32>
    %21 = vector.broadcast %20 : vector<8x1xf32> to vector<8x128xf32>
    %22 = arith.addf %19, %21 : vector<8x128xf32>
    %cst_24 = arith.constant 2.000000e-01 : f32
    %23 = vector.broadcast %cst_24 : f32 to vector<8x128xf32>
    %24 = arith.mulf %23, %22 : vector<8x128xf32>
    %25 = arith.maximumf %22, %24 : vector<8x128xf32>
    %cst_25 = arith.constant 0.000000e+00 : f32
    %26 = vector.broadcast %cst_25 : f32 to vector<8x128xf32>
    %27 = arith.select %6, %25, %26 : vector<8x128xi1>, vector<8x128xf32>
    %c0_26 = arith.constant 0 : index
    %c1_27 = arith.constant 1 : index
    %28 = vector.load %arg9[%c0_26, %c1_27] : memref<8x130xf32, #tpu.memory_space<vmem>>, vector<8x128xf32>
    tpu.vector_store %arg9[%c0_26, %c1_27], %27 {strides = array<i32>} : memref<8x130xf32, #tpu.memory_space<vmem>>, vector<8x128xf32>,
    %c0_28 = arith.constant 0 : index
    %c0_29 = arith.constant 0 : index
    %29 = vector.load %arg9[%c0_28, %c0_29] : memref<8x130xf32, #tpu.memory_space<vmem>>, vector<8x128xf32>
    %c0_30 = arith.constant 0 : index
    %c0_31 = arith.constant 0 : index
    %30 = vector.load %arg10[%c0_30, %c0_31] : memref<24x128xf32, #tpu.memory_space<vmem>>, vector<8x128xf32>
    tpu.vector_store %arg10[%c0_30, %c0_31], %29 {strides = array<i32>} : memref<24x128xf32, #tpu.memory_space<vmem>>, vector<8x128xf32>,
    %c0_32 = arith.constant 0 : index
    %c1_33 = arith.constant 1 : index
    %31 = vector.load %arg9[%c0_32, %c1_33] : memref<8x130xf32, #tpu.memory_space<vmem>>, vector<8x128xf32>
    %c8_34 = arith.constant 8 : index
    %c0_35 = arith.constant 0 : index
    %32 = vector.load %arg10[%c8_34, %c0_35] : memref<24x128xf32, #tpu.memory_space<vmem>>, vector<8x128xf32>
    tpu.vector_store %arg10[%c8_34, %c0_35], %31 {strides = array<i32>} : memref<24x128xf32, #tpu.memory_space<vmem>>, vector<8x128xf32>,
    %c0_36 = arith.constant 0 : index
    %c2_37 = arith.constant 2 : index
    %33 = vector.load %arg9[%c0_36, %c2_37] : memref<8x130xf32, #tpu.memory_space<vmem>>, vector<8x128xf32>
    %c16_38 = arith.constant 16 : index
    %c0_39 = arith.constant 0 : index
    %34 = vector.load %arg10[%c16_38, %c0_39] : memref<24x128xf32, #tpu.memory_space<vmem>>, vector<8x128xf32>
    tpu.vector_store %arg10[%c16_38, %c0_39], %33 {strides = array<i32>} : memref<24x128xf32, #tpu.memory_space<vmem>>, vector<8x128xf32>,
    %c0_40 = arith.constant 0 : index
    %c0_41 = arith.constant 0 : index
    %35 = vector.load %arg4[%c0_40, %c0_41] : memref<8x24xbf16, #tpu.memory_space<vmem>>, vector<8x24xbf16>
    %c0_42 = arith.constant 0 : index
    %c0_43 = arith.constant 0 : index
    %36 = vector.load %arg10[%c0_42, %c0_43] : memref<24x128xf32, #tpu.memory_space<vmem>>, vector<24x128xf32>
    %37 = arith.truncf %36 : vector<24x128xf32> to vector<24x128xbf16>
    %cst_44 = arith.constant dense<0.000000e+00> : vector<8x128xf32>
    %38 = tpu.matmul %35, %37, %cst_44 {dimension_numbers = #tpu.dot_dimension_numbers<[1], [0], [0], [1], [0, 0, 1, 1], [], []>} : vector<8x24xbf16>, vector<24x128xbf16>, vector<8x128xf32> -> vector<8x128xf32>
    %c0_45 = arith.constant 0 : index
    %c0_46 = arith.constant 0 : index
    %39 = vector.load %arg5[%c0_45, %c0_46] : memref<8x1xf32, #tpu.memory_space<vmem>>, vector<8x1xf32>
    %40 = vector.broadcast %39 : vector<8x1xf32> to vector<8x128xf32>
    %41 = arith.addf %38, %40 : vector<8x128xf32>
    %c0_47 = arith.constant 0 : index
    %c0_48 = arith.constant 0 : index
    %42 = vector.load %arg6[%c0_47, %c0_48] : memref<8x4xbf16, #tpu.memory_space<vmem>>, vector<8x4xbf16>
    %43 = arith.truncf %8 : vector<4x128xf32> to vector<4x128xbf16>
    %cst_49 = arith.constant dense<0.000000e+00> : vector<8x128xf32>
    %44 = tpu.matmul %42, %43, %cst_49 {dimension_numbers = #tpu.dot_dimension_numbers<[1], [0], [0], [1], [0, 0, 1, 1], [], []>} : vector<8x4xbf16>, vector<4x128xbf16>, vector<8x128xf32> -> vector<8x128xf32>
    %c0_50 = arith.constant 0 : index
    %c0_51 = arith.constant 0 : index
    %45 = vector.load %arg7[%c0_50, %c0_51] : memref<8x1xf32, #tpu.memory_space<vmem>>, vector<8x1xf32>
    %46 = vector.broadcast %45 : vector<8x1xf32> to vector<8x128xf32>
    %47 = arith.addf %44, %46 : vector<8x128xf32>
    %48 = arith.addf %47, %41 : vector<8x128xf32>
    %cst_52 = arith.constant 2.000000e-01 : f32
    %49 = vector.broadcast %cst_52 : f32 to vector<8x128xf32>
    %50 = arith.mulf %49, %48 : vector<8x128xf32>
    %51 = arith.maximumf %48, %50 : vector<8x128xf32>
    %c0_53 = arith.constant 0 : index
    %c0_54 = arith.constant 0 : index
    %c0_55 = arith.constant 0 : index
    %52 = vector.load %arg8[%c0_53, %c0_54, %c0_55] : memref<2x8x128xf32, #tpu.memory_space<vmem>>, vector<1x8x128xf32>
    %53 = vector.shape_cast %52 : vector<1x8x128xf32> to vector<8x128xf32>
    %54 = vector.shape_cast %51 : vector<8x128xf32> to vector<1x8x128xf32>
    tpu.vector_store %arg8[%c0_53, %c0_54, %c0_55], %54 {strides = array<i32>} : memref<2x8x128xf32, #tpu.memory_space<vmem>>, vector<1x8x128xf32>,
    %c1_56 = arith.constant 1 : index
    %c0_57 = arith.constant 0 : index
    %c0_58 = arith.constant 0 : index
    %55 = vector.load %arg1[%c1_56, %c0_57, %c0_58] : memref<2x4x128xf32, #tpu.memory_space<vmem>>, vector<1x4x128xf32>
    %56 = vector.shape_cast %55 : vector<1x4x128xf32> to vector<4x128xf32>
    %c0_59 = arith.constant 0 : index
    %c1_60 = arith.constant 1 : index
    %57 = vector.load %arg9[%c0_59, %c1_60] : memref<8x130xf32, #tpu.memory_space<vmem>>, vector<4x128xf32>
    tpu.vector_store %arg9[%c0_59, %c1_60], %56 {strides = array<i32>} : memref<8x130xf32, #tpu.memory_space<vmem>>, vector<4x128xf32>,
    %c0_61 = arith.constant 0 : index
    %c0_62 = arith.constant 0 : index
    %58 = vector.load %arg9[%c0_61, %c0_62] : memref<8x130xf32, #tpu.memory_space<vmem>>, vector<4x128xf32>
    %c0_63 = arith.constant 0 : index
    %c0_64 = arith.constant 0 : index
    %59 = vector.load %arg10[%c0_63, %c0_64] : memref<24x128xf32, #tpu.memory_space<vmem>>, vector<4x128xf32>
    tpu.vector_store %arg10[%c0_63, %c0_64], %58 {strides = array<i32>} : memref<24x128xf32, #tpu.memory_space<vmem>>, vector<4x128xf32>,
    %c0_65 = arith.constant 0 : index
    %c1_66 = arith.constant 1 : index
    %60 = vector.load %arg9[%c0_65, %c1_66] : memref<8x130xf32, #tpu.memory_space<vmem>>, vector<4x128xf32>
    %c8_67 = arith.constant 8 : index
    %c0_68 = arith.constant 0 : index
    %61 = vector.load %arg10[%c8_67, %c0_68] : memref<24x128xf32, #tpu.memory_space<vmem>>, vector<4x128xf32>
    tpu.vector_store %arg10[%c8_67, %c0_68], %60 {strides = array<i32>} : memref<24x128xf32, #tpu.memory_space<vmem>>, vector<4x128xf32>,
    %c0_69 = arith.constant 0 : index
    %c2_70 = arith.constant 2 : index
    %62 = vector.load %arg9[%c0_69, %c2_70] : memref<8x130xf32, #tpu.memory_space<vmem>>, vector<4x128xf32>
    %c16_71 = arith.constant 16 : index
    %c0_72 = arith.constant 0 : index
    %63 = vector.load %arg10[%c16_71, %c0_72] : memref<24x128xf32, #tpu.memory_space<vmem>>, vector<4x128xf32>
    tpu.vector_store %arg10[%c16_71, %c0_72], %62 {strides = array<i32>} : memref<24x128xf32, #tpu.memory_space<vmem>>, vector<4x128xf32>,
    %c0_73 = arith.constant 0 : index
    %c0_74 = arith.constant 0 : index
    %64 = vector.load %arg2[%c0_73, %c0_74] : memref<8x24xbf16, #tpu.memory_space<vmem>>, vector<8x24xbf16>
    %c0_75 = arith.constant 0 : index
    %c0_76 = arith.constant 0 : index
    %65 = vector.load %arg10[%c0_75, %c0_76] : memref<24x128xf32, #tpu.memory_space<vmem>>, vector<24x128xf32>
    %66 = arith.truncf %65 : vector<24x128xf32> to vector<24x128xbf16>
    %cst_77 = arith.constant dense<0.000000e+00> : vector<8x128xf32>
    %67 = tpu.matmul %64, %66, %cst_77 {dimension_numbers = #tpu.dot_dimension_numbers<[1], [0], [0], [1], [0, 0, 1, 1], [], []>} : vector<8x24xbf16>, vector<24x128xbf16>, vector<8x128xf32> -> vector<8x128xf32>
    %c0_78 = arith.constant 0 : index
    %c0_79 = arith.constant 0 : index
    %68 = vector.load %arg3[%c0_78, %c0_79] : memref<8x1xf32, #tpu.memory_space<vmem>>, vector<8x1xf32>
    %69 = vector.broadcast %68 : vector<8x1xf32> to vector<8x128xf32>
    %70 = arith.addf %67, %69 : vector<8x128xf32>
    %cst_80 = arith.constant 2.000000e-01 : f32
    %71 = vector.broadcast %cst_80 : f32 to vector<8x128xf32>
    %72 = arith.mulf %71, %70 : vector<8x128xf32>
    %73 = arith.maximumf %70, %72 : vector<8x128xf32>
    %cst_81 = arith.constant 0.000000e+00 : f32
    %74 = vector.broadcast %cst_81 : f32 to vector<8x128xf32>
    %75 = arith.select %6, %73, %74 : vector<8x128xi1>, vector<8x128xf32>
    %c0_82 = arith.constant 0 : index
    %c1_83 = arith.constant 1 : index
    %76 = vector.load %arg9[%c0_82, %c1_83] : memref<8x130xf32, #tpu.memory_space<vmem>>, vector<8x128xf32>
    tpu.vector_store %arg9[%c0_82, %c1_83], %75 {strides = array<i32>} : memref<8x130xf32, #tpu.memory_space<vmem>>, vector<8x128xf32>,
    %c0_84 = arith.constant 0 : index
    %c0_85 = arith.constant 0 : index
    %77 = vector.load %arg9[%c0_84, %c0_85] : memref<8x130xf32, #tpu.memory_space<vmem>>, vector<8x128xf32>
    %c0_86 = arith.constant 0 : index
    %c0_87 = arith.constant 0 : index
    %78 = vector.load %arg10[%c0_86, %c0_87] : memref<24x128xf32, #tpu.memory_space<vmem>>, vector<8x128xf32>
    tpu.vector_store %arg10[%c0_86, %c0_87], %77 {strides = array<i32>} : memref<24x128xf32, #tpu.memory_space<vmem>>, vector<8x128xf32>,
    %c0_88 = arith.constant 0 : index
    %c1_89 = arith.constant 1 : index
    %79 = vector.load %arg9[%c0_88, %c1_89] : memref<8x130xf32, #tpu.memory_space<vmem>>, vector<8x128xf32>
    %c8_90 = arith.constant 8 : index
    %c0_91 = arith.constant 0 : index
    %80 = vector.load %arg10[%c8_90, %c0_91] : memref<24x128xf32, #tpu.memory_space<vmem>>, vector<8x128xf32>
    tpu.vector_store %arg10[%c8_90, %c0_91], %79 {strides = array<i32>} : memref<24x128xf32, #tpu.memory_space<vmem>>, vector<8x128xf32>,
    %c0_92 = arith.constant 0 : index
    %c2_93 = arith.constant 2 : index
    %81 = vector.load %arg9[%c0_92, %c2_93] : memref<8x130xf32, #tpu.memory_space<vmem>>, vector<8x128xf32>
    %c16_94 = arith.constant 16 : index
    %c0_95 = arith.constant 0 : index
    %82 = vector.load %arg10[%c16_94, %c0_95] : memref<24x128xf32, #tpu.memory_space<vmem>>, vector<8x128xf32>
    tpu.vector_store %arg10[%c16_94, %c0_95], %81 {strides = array<i32>} : memref<24x128xf32, #tpu.memory_space<vmem>>, vector<8x128xf32>,
    %c0_96 = arith.constant 0 : index
    %c0_97 = arith.constant 0 : index
    %83 = vector.load %arg4[%c0_96, %c0_97] : memref<8x24xbf16, #tpu.memory_space<vmem>>, vector<8x24xbf16>
    %c0_98 = arith.constant 0 : index
    %c0_99 = arith.constant 0 : index
    %84 = vector.load %arg10[%c0_98, %c0_99] : memref<24x128xf32, #tpu.memory_space<vmem>>, vector<24x128xf32>
    %85 = arith.truncf %84 : vector<24x128xf32> to vector<24x128xbf16>
    %cst_100 = arith.constant dense<0.000000e+00> : vector<8x128xf32>
    %86 = tpu.matmul %83, %85, %cst_100 {dimension_numbers = #tpu.dot_dimension_numbers<[1], [0], [0], [1], [0, 0, 1, 1], [], []>} : vector<8x24xbf16>, vector<24x128xbf16>, vector<8x128xf32> -> vector<8x128xf32>
    %c0_101 = arith.constant 0 : index
    %c0_102 = arith.constant 0 : index
    %87 = vector.load %arg5[%c0_101, %c0_102] : memref<8x1xf32, #tpu.memory_space<vmem>>, vector<8x1xf32>
    %88 = vector.broadcast %87 : vector<8x1xf32> to vector<8x128xf32>
    %89 = arith.addf %86, %88 : vector<8x128xf32>
    %c0_103 = arith.constant 0 : index
    %c0_104 = arith.constant 0 : index
    %90 = vector.load %arg6[%c0_103, %c0_104] : memref<8x4xbf16, #tpu.memory_space<vmem>>, vector<8x4xbf16>
    %91 = arith.truncf %56 : vector<4x128xf32> to vector<4x128xbf16>
    %cst_105 = arith.constant dense<0.000000e+00> : vector<8x128xf32>
    %92 = tpu.matmul %90, %91, %cst_105 {dimension_numbers = #tpu.dot_dimension_numbers<[1], [0], [0], [1], [0, 0, 1, 1], [], []>} : vector<8x4xbf16>, vector<4x128xbf16>, vector<8x128xf32> -> vector<8x128xf32>
    %c0_106 = arith.constant 0 : index
    %c0_107 = arith.constant 0 : index
    %93 = vector.load %arg7[%c0_106, %c0_107] : memref<8x1xf32, #tpu.memory_space<vmem>>, vector<8x1xf32>
    %94 = vector.broadcast %93 : vector<8x1xf32> to vector<8x128xf32>
    %95 = arith.addf %92, %94 : vector<8x128xf32>
    %96 = arith.addf %95, %89 : vector<8x128xf32>
    %cst_108 = arith.constant 2.000000e-01 : f32
    %97 = vector.broadcast %cst_108 : f32 to vector<8x128xf32>
    %98 = arith.mulf %97, %96 : vector<8x128xf32>
    %99 = arith.maximumf %96, %98 : vector<8x128xf32>
    %c1_109 = arith.constant 1 : index
    %c0_110 = arith.constant 0 : index
    %c0_111 = arith.constant 0 : index
    %100 = vector.load %arg8[%c1_109, %c0_110, %c0_111] : memref<2x8x128xf32, #tpu.memory_space<vmem>>, vector<1x8x128xf32>
    %101 = vector.shape_cast %100 : vector<1x8x128xf32> to vector<8x128xf32>
    %102 = vector.shape_cast %99 : vector<8x128xf32> to vector<1x8x128xf32>
    tpu.vector_store %arg8[%c1_109, %c0_110, %c0_111], %102 {strides = array<i32>} : memref<2x8x128xf32, #tpu.memory_space<vmem>>, vector<1x8x128xf32>,
    return
  }
  func.func @transform_0(%arg0: i32) -> (i32, i32, i32) {
    %c0_i32 = arith.constant 0 : i32
    %c0_i32_0 = arith.constant 0 : i32
    %c0_i32_1 = arith.constant 0 : i32
    return %arg0, %c0_i32, %c0_i32_0 : i32, i32, i32
  }
  func.func @transform_1(%arg0: i32) -> (i32, i32) {
    %c0_i32 = arith.constant 0 : i32
    %c0_i32_0 = arith.constant 0 : i32
    %c0_i32_1 = arith.constant 0 : i32
    return %c0_i32, %c0_i32_0 : i32, i32
  }
  func.func @transform_2(%arg0: i32) -> (i32, i32) {
    %c0_i32 = arith.constant 0 : i32
    %c0_i32_0 = arith.constant 0 : i32
    %c0_i32_1 = arith.constant 0 : i32
    return %c0_i32, %c0_i32_0 : i32, i32
  }
  func.func @transform_3(%arg0: i32) -> (i32, i32) {
    %c0_i32 = arith.constant 0 : i32
    %c0_i32_0 = arith.constant 0 : i32
    %c0_i32_1 = arith.constant 0 : i32
    return %c0_i32, %c0_i32_0 : i32, i32
  }
  func.func @transform_4(%arg0: i32) -> (i32, i32) {
    %c0_i32 = arith.constant 0 : i32
    %c0_i32_0 = arith.constant 0 : i32
    %c0_i32_1 = arith.constant 0 : i32
    return %c0_i32, %c0_i32_0 : i32, i32
  }
  func.func @transform_5(%arg0: i32) -> (i32, i32) {
    %c0_i32 = arith.constant 0 : i32
    %c0_i32_0 = arith.constant 0 : i32
    %c0_i32_1 = arith.constant 0 : i32
    return %c0_i32, %c0_i32_0 : i32, i32
  }
  func.func @transform_6(%arg0: i32) -> (i32, i32) {
    %c0_i32 = arith.constant 0 : i32
    %c0_i32_0 = arith.constant 0 : i32
    %c0_i32_1 = arith.constant 0 : i32
    return %c0_i32, %c0_i32_0 : i32, i32
  }
  func.func @transform_7(%arg0: i32) -> (i32, i32, i32) {
    %c0_i32 = arith.constant 0 : i32
    %c0_i32_0 = arith.constant 0 : i32
    %c0_i32_1 = arith.constant 0 : i32
    return %arg0, %c0_i32, %c0_i32_0 : i32, i32, i32
  }
}

</mosaic_0001>

<llo_original>
// kernel: tpu_custom_call.1
$region0: #{tpu_custom_call.1}
  #allocation0 [shape = 'u32[]', space=smem, size = 0x4, offset = 0x4, fixed_abs, tag = 'smem constant byte address 0x4 - core index']
  #allocation1 [shape = 'u32[144,128]{1,0:T(1,128)}', space=vmem, size = 0x12000, scoped, tag = 'internal scratch']
  #allocation2 [shape = 'f32[8,130]{1,0:T(8,128)}', space=vmem, size = 0x2000, scoped, tag = 'scratch operand']
  #allocation3 [shape = 'f32[24,128]{1,0:T(8,128)}', space=vmem, size = 0x3000, scoped, tag = 'scratch operand']
  %s0 = inlined_call_operand.vmem [shape: f32[2,4,128], index: 0, kind: input, shape index: {}]
  %s1 = inlined_call_operand.vmem [shape: bf16[8,24], index: 1, kind: input, shape index: {}]
  %s2 = inlined_call_operand.vmem [shape: f32[8,1], index: 2, kind: input, shape index: {}]
  %s3 = inlined_call_operand.vmem [shape: bf16[8,24], index: 3, kind: input, shape index: {}]
  %s4 = inlined_call_operand.vmem [shape: f32[8,1], index: 4, kind: input, shape index: {}]
  %s5 = inlined_call_operand.vmem [shape: bf16[8,4], index: 5, kind: input, shape index: {}]
  %s6 = inlined_call_operand.vmem [shape: f32[8,1], index: 6, kind: input, shape index: {}]
  %s7 = inlined_call_operand.hbm [shape: f32[2,8,128], index: 7, kind: output, shape index: {}]
  %s8 = sld [smem:[#allocation0]]
  $region38: #{tpu_custom_call.1} parent=0
    _
  %s10 = ssub.s32 1, %s8
  %s11 = scalar_select 0, %s10, %s8
  $region1: #{tpu_custom_call.1} parent=0
    #allocation4 [shape = 'u8[8192]{0}', space=vmem, size = 0x2000, scoped, tag = 'output window, operand 0, single buffered']
    #allocation5 [shape = 's32[1]{0}', space=sflag, size = 0x4, scoped, tag = 'scoped memory for tpu_custom_call.1']
    %12 = vsyncpa [#allocation5], 0
    // Predicated region
    $region2: #{tpu_custom_call.1} parent=1 // pred_check
      _
    $region3: #{tpu_custom_call.1} parent=1 // pred_check_branch
      %14 = sbr.rel (0) target = $region5
    $region4: #{tpu_custom_call.1} parent=1 // pred_region
      _
    $region5: #{tpu_custom_call.1} parent=1 // pred_fallthru
      _
    // Predicated region
    $region6: #{tpu_custom_call.1} parent=1 // pred_check
      _
    $region7: #{tpu_custom_call.1} parent=1 // pred_check_branch
      %16 = sbr.rel (0) target = $region9
    $region8: #{tpu_custom_call.1} parent=1 // pred_region
      _
    $region9: #{tpu_custom_call.1} parent=1 // pred_fallthru
      _
    // Predicated region
    $region10: #{tpu_custom_call.1} parent=1 // pred_check
      _
    $region11: #{tpu_custom_call.1} parent=1 // pred_check_branch
      %18 = sbr.rel (0) target = $region13
    $region12: #{tpu_custom_call.1} parent=1 // pred_region
      _
    $region13: #{tpu_custom_call.1} parent=1 // pred_fallthru
      _
    // Predicated region
    $region14: #{tpu_custom_call.1} parent=1 // pred_check
      _
    $region15: #{tpu_custom_call.1} parent=1 // pred_check_branch
      %20 = sbr.rel (0) target = $region17
    $region16: #{tpu_custom_call.1} parent=1 // pred_region
      _
    $region17: #{tpu_custom_call.1} parent=1 // pred_fallthru
      _
    // Predicated region
    $region18: #{tpu_custom_call.1} parent=1 // pred_check
      _
    $region19: #{tpu_custom_call.1} parent=1 // pred_check_branch
      %22 = sbr.rel (0) target = $region21
    $region20: #{tpu_custom_call.1} parent=1 // pred_region
      _
    $region21: #{tpu_custom_call.1} parent=1 // pred_fallthru
      _
    // Predicated region
    $region22: #{tpu_custom_call.1} parent=1 // pred_check
      _
    $region23: #{tpu_custom_call.1} parent=1 // pred_check_branch
      %24 = sbr.rel (0) target = $region25
    $region24: #{tpu_custom_call.1} parent=1 // pred_region
      _
    $region25: #{tpu_custom_call.1} parent=1 // pred_fallthru
      _
    // Predicated region
    $region26: #{tpu_custom_call.1} parent=1 // pred_check
      _
    $region27: #{tpu_custom_call.1} parent=1 // pred_check_branch
      %26 = sbr.rel (0) target = $region29
    $region28: #{tpu_custom_call.1} parent=1 // pred_region
      _
    $region29: #{tpu_custom_call.1} parent=1 // pred_fallthru
      _
    %28 = vst [vmem:[#allocation2] sm:$0xff] 0.0
    %vm29 = vcmask 15360
    %30 = vst.msk [vmem:[#allocation2 + $0x8] sm:$0xff] %vm29, 0.0
    %31 = vst [vmem:[#allocation3] sm:$0xff] 0.0
    %32 = vst [vmem:[#allocation3 + $0x8] sm:$0xff] 0.0
    %33 = vst [vmem:[#allocation3 + $0x10] sm:$0xff] 0.0
    %v34 = vlaneseq
    %v35 = vand.u32 %v34, 127
    %vm36 = vcmp.lt.s32.totalorder %v35, 16
    %v37 = vld [vmem:[%s0] sm:$0xf]
    %39 = vrot.lane.b32.xlu0 %v37, 1
    %v40 = vpop.permute.xlu0 %39
    %vm42 = vcmask 1043464
    %43 = vst.msk [vmem:[#allocation2] sm:$0xf] %vm42, %v40
    %vm44 = vcmask 3072
    %45 = vst.msk [vmem:[#allocation2 + $0x8] sm:$0xf] %vm44, %v40
    %v46 = vld [vmem:[#allocation2] sm:$0xf]
    %47 = vst [vmem:[#allocation3] sm:$0xf] %v46
    %v48 = vld [vmem:[#allocation2] sm:$0xf]
    %v49 = vld [vmem:[#allocation2 + $0x8] sm:$0xf]
    %52 = vrot.lane.b32.xlu0 %v48, 127
    %v53 = vpop.permute.xlu0 %52
    %54 = vrot.lane.b32.xlu0 %v49, 127
    %v55 = vpop.permute.xlu0 %54
    %vm56 = vcmask 1039360
    %v57 = vsel %vm56, %v53, %v55
    %59 = vst [vmem:[#allocation3 + $0x8] sm:$0xf] %v57
    %v60 = vld [vmem:[#allocation2] sm:$0xf]
    %v61 = vld [vmem:[#allocation2 + $0x8] sm:$0xf]
    %64 = vrot.lane.b32.xlu0 %v60, 126
    %v65 = vpop.permute.xlu0 %64
    %66 = vrot.lane.b32.xlu0 %v61, 126
    %v67 = vpop.permute.xlu0 %66
    %vm68 = vcmask 1031168
    %v69 = vsel %vm68, %v65, %v67
    %71 = vst [vmem:[#allocation3 + $0x10] sm:$0xf] %v69
    %v72 = vld [vmem:[%s1] sm:$0xf]
    %v73 = vld [vmem:[#allocation3] sm:$0xff]
    %v74 = vld [vmem:[#allocation3 + $0x8] sm:$0xff]
    %v75 = vld [vmem:[#allocation3 + $0x10] sm:$0xff]
    %v76 = vpack.c.bf16 %v74, %v73
    %v77 = vpack.c.bf16 %v75, %v75
    %v78 = vld [vmem:[%s2] sm:$0xff]
    %80 = vset.pattern.permute.xlu0 0
    %81 = vperm.xlu0 %80, %v78
    %v82 = vpop.permute.xlu0 %81
    %vm84 = vcmask 195584
    %v86 = vsel %vm84, %v72, 0
    %vm88 = vcmask 1043456
    %v90 = vsel %vm88, %v77, 0
    %92 = vmatprep.subr.bf16.mxu0 0
    %93 = vmatpush1.bf16.msra.mxu0 %v76
    %94 = vmatprep.subr.bf16.mxu0 0
    %95 = vmatpush1.bf16.msra.mxu0 %v90
    %96 = vmatprep.subr.bf16.mxu0 0
    %97 = vmatpush1.bf16.msra.mxu0 0
    %98 = vmatprep.subr.bf16.mxu0 0
    %99 = vmatpush1.bf16.msra.mxu0 0
    %100 = vmatprep.subr.bf16.mxu0 0
    %101 = vmatpush1.bf16.msra.mxu0 0
    %102 = vmatprep.subr.bf16.mxu0 0
    %103 = vmatpush1.bf16.msra.mxu0 0
    %104 = vmatprep.subr.bf16.mxu0 0
    %105 = vmatpush1.bf16.msra.mxu0 0
    %106 = vmatprep.subr.bf16.mxu0 0
    %107 = vmatpush1.bf16.msra.mxu0 0
    %108 = vmatprep.subr.bf16.mxu0 0
    %109 = vmatpush1.bf16.msra.mxu0 0
    %110 = vmatprep.subr.bf16.mxu0 0
    %111 = vmatpush1.bf16.msra.mxu0 0
    %112 = vmatprep.subr.bf16.mxu0 0
    %113 = vmatpush1.bf16.msra.mxu0 0
    %114 = vmatprep.subr.bf16.mxu0 0
    %115 = vmatpush1.bf16.msra.mxu0 0
    %116 = vmatprep.subr.bf16.mxu0 0
    %117 = vmatpush1.bf16.msra.mxu0 0
    %118 = vmatprep.subr.bf16.mxu0 0
    %119 = vmatpush1.bf16.msra.mxu0 0
    %120 = vmatprep.subr.bf16.mxu0 0
    %121 = vmatpush1.bf16.msra.mxu0 0
    %122 = vmatprep.subr.bf16.mxu0 0
    %123 = vmatpush1.bf16.msra.mxu0 0
    %124 = vmatprep.mubr.bf16.mxu0 0
    %125 = vmatmul.mubr.bf16.gmra.mrb[0].mxu0 %v86
    %v126 = vpop.f32.mrb[0].mxu0
    %v127 = vadd.f32 %v82, %v126
    %v128 = vpop.f32.mrb[0].mxu0
    %v129 = vpop.f32.mrb[0].mxu0
    %v130 = vpop.f32.mrb[0].mxu0
    %131 = vdwg.mxu0
    %v132 = vmul.f32 %v127, 0.2
    %v133 = vmax.f32 %v127, %v132
    %v134 = vsel %vm36, %v133, 0.0
    %136 = vrot.lane.b32.xlu0 %v134, 1
    %v137 = vpop.permute.xlu0 %136
    %vm139 = vcmask 1047560
    %140 = vst.msk [vmem:[#allocation2] sm:$0xff] %vm139, %v137
    %vm141 = vcmask 7168
    %142 = vst.msk [vmem:[#allocation2 + $0x8] sm:$0xff] %vm141, %v137
    %v143 = vld [vmem:[#allocation2] sm:$0xff]
    %144 = vst [vmem:[#allocation3] sm:$0xff] %v143
    %v145 = vld [vmem:[#allocation2] sm:$0xff]
    %v146 = vld [vmem:[#allocation2 + $0x8] sm:$0xff]
    %149 = vrot.lane.b32.xlu0 %v145, 127
    %v150 = vpop.permute.xlu0 %149
    %151 = vrot.lane.b32.xlu0 %v146, 127
    %v152 = vpop.permute.xlu0 %151
    %v153 = vsel %vm56, %v150, %v152
    %155 = vst [vmem:[#allocation3 + $0x8] sm:$0xff] %v153
    %v156 = vld [vmem:[#allocation2] sm:$0xff]
    %v157 = vld [vmem:[#allocation2 + $0x8] sm:$0xff]
    %160 = vrot.lane.b32.xlu0 %v156, 126
    %v161 = vpop.permute.xlu0 %160
    %162 = vrot.lane.b32.xlu0 %v157, 126
    %v163 = vpop.permute.xlu0 %162
    %v164 = vsel %vm68, %v161, %v163
    %166 = vst [vmem:[#allocation3 + $0x10] sm:$0xff] %v164
    %v167 = vld [vmem:[%s3] sm:$0xf]
    %v168 = vld [vmem:[#allocation3] sm:$0xff]
    %v169 = vld [vmem:[#allocation3 + $0x8] sm:$0xff]
    %v170 = vld [vmem:[#allocation3 + $0x10] sm:$0xff]
    %v171 = vpack.c.bf16 %v169, %v168
    %v172 = vpack.c.bf16 %v170, %v170
    %v173 = vld [vmem:[%s4] sm:$0xff]
    %175 = vset.pattern.permute.xlu0 0
    %176 = vperm.xlu0 %175, %v173
    %v177 = vpop.permute.xlu0 %176
    %v180 = vsel %vm84, %v167, 0
    %v183 = vsel %vm88, %v172, 0
    %185 = vmatprep.subr.bf16.mxu0 0
    %186 = vmatpush1.bf16.msra.mxu0 %v171
    %187 = vmatprep.subr.bf16.mxu0 0
    %188 = vmatpush1.bf16.msra.mxu0 %v183
    %189 = vmatprep.subr.bf16.mxu0 0
    %190 = vmatpush1.bf16.msra.mxu0 0
    %191 = vmatprep.subr.bf16.mxu0 0
    %192 = vmatpush1.bf16.msra.mxu0 0
    %193 = vmatprep.subr.bf16.mxu0 0
    %194 = vmatpush1.bf16.msra.mxu0 0
    %195 = vmatprep.subr.bf16.mxu0 0
    %196 = vmatpush1.bf16.msra.mxu0 0
    %197 = vmatprep.subr.bf16.mxu0 0
    %198 = vmatpush1.bf16.msra.mxu0 0
    %199 = vmatprep.subr.bf16.mxu0 0
    %200 = vmatpush1.bf16.msra.mxu0 0
    %201 = vmatprep.subr.bf16.mxu0 0
    %202 = vmatpush1.bf16.msra.mxu0 0
    %203 = vmatprep.subr.bf16.mxu0 0
    %204 = vmatpush1.bf16.msra.mxu0 0
    %205 = vmatprep.subr.bf16.mxu0 0
    %206 = vmatpush1.bf16.msra.mxu0 0
    %207 = vmatprep.subr.bf16.mxu0 0
    %208 = vmatpush1.bf16.msra.mxu0 0
    %209 = vmatprep.subr.bf16.mxu0 0
    %210 = vmatpush1.bf16.msra.mxu0 0
    %211 = vmatprep.subr.bf16.mxu0 0
    %212 = vmatpush1.bf16.msra.mxu0 0
    %213 = vmatprep.subr.bf16.mxu0 0
    %214 = vmatpush1.bf16.msra.mxu0 0
    %215 = vmatprep.subr.bf16.mxu0 0
    %216 = vmatpush1.bf16.msra.mxu0 0
    %217 = vmatprep.mubr.bf16.mxu0 0
    %218 = vmatmul.mubr.bf16.gmra.mrb[0].mxu0 %v180
    %v219 = vpop.f32.mrb[0].mxu0
    %v220 = vadd.f32 %v177, %v219
    %v221 = vpop.f32.mrb[0].mxu0
    %v222 = vpop.f32.mrb[0].mxu0
    %v223 = vpop.f32.mrb[0].mxu0
    %224 = vdwg.mxu0
    %v225 = vld [vmem:[%s5] sm:$0xf]
    %v226 = vpack.c.bf16 %v37, %v37
    %v227 = vld [vmem:[%s6] sm:$0xff]
    %229 = vset.pattern.permute.xlu0 0
    %230 = vperm.xlu0 %229, %v227
    %v231 = vpop.permute.xlu0 %230
    %vm233 = vcmask 31744
    %v235 = vsel %vm233, %v225, 0
    %vm237 = vcmask 1041408
    %v239 = vsel %vm237, %v226, 0
    %241 = vmatprep.subr.bf16.mxu0 0
    %242 = vmatpush1.bf16.msra.mxu0 %v239
    %243 = vmatprep.subr.bf16.mxu0 0
    %244 = vmatpush1.bf16.msra.mxu0 0
    %245 = vmatprep.subr.bf16.mxu0 0
    %246 = vmatpush1.bf16.msra.mxu0 0
    %247 = vmatprep.subr.bf16.mxu0 0
    %248 = vmatpush1.bf16.msra.mxu0 0
    %249 = vmatprep.subr.bf16.mxu0 0
    %250 = vmatpush1.bf16.msra.mxu0 0
    %251 = vmatprep.subr.bf16.mxu0 0
    %252 = vmatpush1.bf16.msra.mxu0 0
    %253 = vmatprep.subr.bf16.mxu0 0
    %254 = vmatpush1.bf16.msra.mxu0 0
    %255 = vmatprep.subr.bf16.mxu0 0
    %256 = vmatpush1.bf16.msra.mxu0 0
    %257 = vmatprep.subr.bf16.mxu0 0
    %258 = vmatpush1.bf16.msra.mxu0 0
    %259 = vmatprep.subr.bf16.mxu0 0
    %260 = vmatpush1.bf16.msra.mxu0 0
    %261 = vmatprep.subr.bf16.mxu0 0
    %262 = vmatpush1.bf16.msra.mxu0 0
    %263 = vmatprep.subr.bf16.mxu0 0
    %264 = vmatpush1.bf16.msra.mxu0 0
    %265 = vmatprep.subr.bf16.mxu0 0
    %266 = vmatpush1.bf16.msra.mxu0 0
    %267 = vmatprep.subr.bf16.mxu0 0
    %268 = vmatpush1.bf16.msra.mxu0 0
    %269 = vmatprep.subr.bf16.mxu0 0
    %270 = vmatpush1.bf16.msra.mxu0 0
    %271 = vmatprep.subr.bf16.mxu0 0
    %272 = vmatpush1.bf16.msra.mxu0 0
    %273 = vmatprep.mubr.bf16.mxu0 0
    %274 = vmatmul.mubr.bf16.gmra.mrb[0].mxu0 %v235
    %v275 = vpop.f32.mrb[0].mxu0
    %v276 = vadd.f32 %v231, %v275
    %v277 = vpop.f32.mrb[0].mxu0
    %v278 = vpop.f32.mrb[0].mxu0
    %v279 = vpop.f32.mrb[0].mxu0
    %280 = vdwg.mxu0
    %v281 = vadd.f32 %v276, %v220
    %v282 = vmul.f32 %v281, 0.2
    %v283 = vmax.f32 %v281, %v282
    %284 = vst [vmem:[#allocation4] sm:$0xff] %v283
    %s285 = scalar_lea.vmem %s0, 4
    %v286 = vld [vmem:[%s285] sm:$0xf]
    %288 = vrot.lane.b32.xlu0 %v286, 1
    %v289 = vpop.permute.xlu0 %288
    %291 = vst.msk [vmem:[#allocation2] sm:$0xf] %vm42, %v289
    %292 = vst.msk [vmem:[#allocation2 + $0x8] sm:$0xf] %vm44, %v289
    %v293 = vld [vmem:[#allocation2] sm:$0xf]
    %294 = vst [vmem:[#allocation3] sm:$0xf] %v293
    %v295 = vld [vmem:[#allocation2] sm:$0xf]
    %v296 = vld [vmem:[#allocation2 + $0x8] sm:$0xf]
    %299 = vrot.lane.b32.xlu0 %v295, 127
    %v300 = vpop.permute.xlu0 %299
    %301 = vrot.lane.b32.xlu0 %v296, 127
    %v302 = vpop.permute.xlu0 %301
    %v303 = vsel %vm56, %v300, %v302
    %305 = vst [vmem:[#allocation3 + $0x8] sm:$0xf] %v303
    %v306 = vld [vmem:[#allocation2] sm:$0xf]
    %v307 = vld [vmem:[#allocation2 + $0x8] sm:$0xf]
    %310 = vrot.lane.b32.xlu0 %v306, 126
    %v311 = vpop.permute.xlu0 %310
    %312 = vrot.lane.b32.xlu0 %v307, 126
    %v313 = vpop.permute.xlu0 %312
    %v314 = vsel %vm68, %v311, %v313
    %316 = vst [vmem:[#allocation3 + $0x10] sm:$0xf] %v314
    %v317 = vld [vmem:[%s1] sm:$0xf]
    %v318 = vld [vmem:[#allocation3] sm:$0xff]
    %v319 = vld [vmem:[#allocation3 + $0x8] sm:$0xff]
    %v320 = vld [vmem:[#allocation3 + $0x10] sm:$0xff]
    %v321 = vpack.c.bf16 %v319, %v318
    %v322 = vpack.c.bf16 %v320, %v320
    %v323 = vld [vmem:[%s2] sm:$0xff]
    %325 = vset.pattern.permute.xlu0 0
    %326 = vperm.xlu0 %325, %v323
    %v327 = vpop.permute.xlu0 %326
    %v330 = vsel %vm84, %v317, 0
    %v333 = vsel %vm88, %v322, 0
    %335 = vmatprep.subr.bf16.mxu0 0
    %336 = vmatpush1.bf16.msra.mxu0 %v321
    %337 = vmatprep.subr.bf16.mxu0 0
    %338 = vmatpush1.bf16.msra.mxu0 %v333
    %339 = vmatprep.subr.bf16.mxu0 0
    %340 = vmatpush1.bf16.msra.mxu0 0
    %341 = vmatprep.subr.bf16.mxu0 0
    %342 = vmatpush1.bf16.msra.mxu0 0
    %343 = vmatprep.subr.bf16.mxu0 0
    %344 = vmatpush1.bf16.msra.mxu0 0
    %345 = vmatprep.subr.bf16.mxu0 0
    %346 = vmatpush1.bf16.msra.mxu0 0
    %347 = vmatprep.subr.bf16.mxu0 0
    %348 = vmatpush1.bf16.msra.mxu0 0
    %349 = vmatprep.subr.bf16.mxu0 0
    %350 = vmatpush1.bf16.msra.mxu0 0
    %351 = vmatprep.subr.bf16.mxu0 0
    %352 = vmatpush1.bf16.msra.mxu0 0
    %353 = vmatprep.subr.bf16.mxu0 0
    %354 = vmatpush1.bf16.msra.mxu0 0
    %355 = vmatprep.subr.bf16.mxu0 0
    %356 = vmatpush1.bf16.msra.mxu0 0
    %357 = vmatprep.subr.bf16.mxu0 0
    %358 = vmatpush1.bf16.msra.mxu0 0
    %359 = vmatprep.subr.bf16.mxu0 0
    %360 = vmatpush1.bf16.msra.mxu0 0
    %361 = vmatprep.subr.bf16.mxu0 0
    %362 = vmatpush1.bf16.msra.mxu0 0
    %363 = vmatprep.subr.bf16.mxu0 0
    %364 = vmatpush1.bf16.msra.mxu0 0
    %365 = vmatprep.subr.bf16.mxu0 0
    %366 = vmatpush1.bf16.msra.mxu0 0
    %367 = vmatprep.mubr.bf16.mxu0 0
    %368 = vmatmul.mubr.bf16.gmra.mrb[0].mxu0 %v330
    %v369 = vpop.f32.mrb[0].mxu0
    %v370 = vadd.f32 %v327, %v369
    %v371 = vpop.f32.mrb[0].mxu0
    %v372 = vpop.f32.mrb[0].mxu0
    %v373 = vpop.f32.mrb[0].mxu0
    %374 = vdwg.mxu0
    %v375 = vmul.f32 %v370, 0.2
    %v376 = vmax.f32 %v370, %v375
    %v377 = vsel %vm36, %v376, 0.0
    %379 = vrot.lane.b32.xlu0 %v377, 1
    %v380 = vpop.permute.xlu0 %379
    %382 = vst.msk [vmem:[#allocation2] sm:$0xff] %vm139, %v380
    %383 = vst.msk [vmem:[#allocation2 + $0x8] sm:$0xff] %vm141, %v380
    %v384 = vld [vmem:[#allocation2] sm:$0xff]
    %385 = vst [vmem:[#allocation3] sm:$0xff] %v384
    %v386 = vld [vmem:[#allocation2] sm:$0xff]
    %v387 = vld [vmem:[#allocation2 + $0x8] sm:$0xff]
    %390 = vrot.lane.b32.xlu0 %v386, 127
    %v391 = vpop.permute.xlu0 %390
    %392 = vrot.lane.b32.xlu0 %v387, 127
    %v393 = vpop.permute.xlu0 %392
    %v394 = vsel %vm56, %v391, %v393
    %396 = vst [vmem:[#allocation3 + $0x8] sm:$0xff] %v394
    %v397 = vld [vmem:[#allocation2] sm:$0xff]
    %v398 = vld [vmem:[#allocation2 + $0x8] sm:$0xff]
    %401 = vrot.lane.b32.xlu0 %v397, 126
    %v402 = vpop.permute.xlu0 %401
    %403 = vrot.lane.b32.xlu0 %v398, 126
    %v404 = vpop.permute.xlu0 %403
    %v405 = vsel %vm68, %v402, %v404
    %407 = vst [vmem:[#allocation3 + $0x10] sm:$0xff] %v405
    %v408 = vld [vmem:[%s3] sm:$0xf]
    %v409 = vld [vmem:[#allocation3] sm:$0xff]
    %v410 = vld [vmem:[#allocation3 + $0x8] sm:$0xff]
    %v411 = vld [vmem:[#allocation3 + $0x10] sm:$0xff]
    %v412 = vpack.c.bf16 %v410, %v409
    %v413 = vpack.c.bf16 %v411, %v411
    %v414 = vld [vmem:[%s4] sm:$0xff]
    %416 = vset.pattern.permute.xlu0 0
    %417 = vperm.xlu0 %416, %v414
    %v418 = vpop.permute.xlu0 %417
    %v421 = vsel %vm84, %v408, 0
    %v424 = vsel %vm88, %v413, 0
    %426 = vmatprep.subr.bf16.mxu0 0
    %427 = vmatpush1.bf16.msra.mxu0 %v412
    %428 = vmatprep.subr.bf16.mxu0 0
    %429 = vmatpush1.bf16.msra.mxu0 %v424
    %430 = vmatprep.subr.bf16.mxu0 0
    %431 = vmatpush1.bf16.msra.mxu0 0
    %432 = vmatprep.subr.bf16.mxu0 0
    %433 = vmatpush1.bf16.msra.mxu0 0
    %434 = vmatprep.subr.bf16.mxu0 0
    %435 = vmatpush1.bf16.msra.mxu0 0
    %436 = vmatprep.subr.bf16.mxu0 0
    %437 = vmatpush1.bf16.msra.mxu0 0
    %438 = vmatprep.subr.bf16.mxu0 0
    %439 = vmatpush1.bf16.msra.mxu0 0
    %440 = vmatprep.subr.bf16.mxu0 0
    %441 = vmatpush1.bf16.msra.mxu0 0
    %442 = vmatprep.subr.bf16.mxu0 0
    %443 = vmatpush1.bf16.msra.mxu0 0
    %444 = vmatprep.subr.bf16.mxu0 0
    %445 = vmatpush1.bf16.msra.mxu0 0
    %446 = vmatprep.subr.bf16.mxu0 0
    %447 = vmatpush1.bf16.msra.mxu0 0
    %448 = vmatprep.subr.bf16.mxu0 0
    %449 = vmatpush1.bf16.msra.mxu0 0
    %450 = vmatprep.subr.bf16.mxu0 0
    %451 = vmatpush1.bf16.msra.mxu0 0
    %452 = vmatprep.subr.bf16.mxu0 0
    %453 = vmatpush1.bf16.msra.mxu0 0
    %454 = vmatprep.subr.bf16.mxu0 0
    %455 = vmatpush1.bf16.msra.mxu0 0
    %456 = vmatprep.subr.bf16.mxu0 0
    %457 = vmatpush1.bf16.msra.mxu0 0
    %458 = vmatprep.mubr.bf16.mxu0 0
    %459 = vmatmul.mubr.bf16.gmra.mrb[0].mxu0 %v421
    %v460 = vpop.f32.mrb[0].mxu0
    %v461 = vadd.f32 %v418, %v460
    %v462 = vpop.f32.mrb[0].mxu0
    %v463 = vpop.f32.mrb[0].mxu0
    %v464 = vpop.f32.mrb[0].mxu0
    %465 = vdwg.mxu0
    %v466 = vld [vmem:[%s5] sm:$0xf]
    %v467 = vpack.c.bf16 %v286, %v286
    %v468 = vld [vmem:[%s6] sm:$0xff]
    %470 = vset.pattern.permute.xlu0 0
    %471 = vperm.xlu0 %470, %v468
    %v472 = vpop.permute.xlu0 %471
    %v475 = vsel %vm233, %v466, 0
    %v478 = vsel %vm237, %v467, 0
    %480 = vmatprep.subr.bf16.mxu0 0
    %481 = vmatpush1.bf16.msra.mxu0 %v478
    %482 = vmatprep.subr.bf16.mxu0 0
    %483 = vmatpush1.bf16.msra.mxu0 0
    %484 = vmatprep.subr.bf16.mxu0 0
    %485 = vmatpush1.bf16.msra.mxu0 0
    %486 = vmatprep.subr.bf16.mxu0 0
    %487 = vmatpush1.bf16.msra.mxu0 0
    %488 = vmatprep.subr.bf16.mxu0 0
    %489 = vmatpush1.bf16.msra.mxu0 0
    %490 = vmatprep.subr.bf16.mxu0 0
    %491 = vmatpush1.bf16.msra.mxu0 0
    %492 = vmatprep.subr.bf16.mxu0 0
    %493 = vmatpush1.bf16.msra.mxu0 0
    %494 = vmatprep.subr.bf16.mxu0 0
    %495 = vmatpush1.bf16.msra.mxu0 0
    %496 = vmatprep.subr.bf16.mxu0 0
    %497 = vmatpush1.bf16.msra.mxu0 0
    %498 = vmatprep.subr.bf16.mxu0 0
    %499 = vmatpush1.bf16.msra.mxu0 0
    %500 = vmatprep.subr.bf16.mxu0 0
    %501 = vmatpush1.bf16.msra.mxu0 0
    %502 = vmatprep.subr.bf16.mxu0 0
    %503 = vmatpush1.bf16.msra.mxu0 0
    %504 = vmatprep.subr.bf16.mxu0 0
    %505 = vmatpush1.bf16.msra.mxu0 0
    %506 = vmatprep.subr.bf16.mxu0 0
    %507 = vmatpush1.bf16.msra.mxu0 0
    %508 = vmatprep.subr.bf16.mxu0 0
    %509 = vmatpush1.bf16.msra.mxu0 0
    %510 = vmatprep.subr.bf16.mxu0 0
    %511 = vmatpush1.bf16.msra.mxu0 0
    %512 = vmatprep.mubr.bf16.mxu0 0
    %513 = vmatmul.mubr.bf16.gmra.mrb[0].mxu0 %v475
    %v514 = vpop.f32.mrb[0].mxu0
    %v515 = vadd.f32 %v472, %v514
    %v516 = vpop.f32.mrb[0].mxu0
    %v517 = vpop.f32.mrb[0].mxu0
    %v518 = vpop.f32.mrb[0].mxu0
    %519 = vdwg.mxu0
    %v520 = vadd.f32 %v515, %v461
    %v521 = vmul.f32 %v520, 0.2
    %v522 = vmax.f32 %v520, %v521
    %s523 = scalar_lea.vmem [#allocation4], 8
    %524 = vst [vmem:[%s523] sm:$0xff] %v522
    // Predicated region
    $region30: #{tpu_custom_call.1} parent=1 // pred_check
      _
    $region31: #{tpu_custom_call.1} parent=1 // pred_check_branch
      %526 = sbr.rel (0) target = $region33
    $region32: #{tpu_custom_call.1} parent=1 // pred_region
      %s528 = ssub.s32 256, 256
      %529 = vsyncadd [#allocation5], %s528
      %s530 = sshll.u32 [#allocation4], 4
      %s531 = int_to_ptr.vmem [resolvable:$true] %s530
      %536 = dma.vmem_to_hbm [thread:$0]  %s531, 256, %s7, [#allocation5], 128, 128, 8
    $region33: #{tpu_custom_call.1} parent=1 // pred_fallthru
      _
    // Predicated region
    $region34: #{tpu_custom_call.1} parent=1 // pred_check
      _
    $region35: #{tpu_custom_call.1} parent=1 // pred_check_branch
      %538 = sbr.rel (0) target = $region37
    $region36: #{tpu_custom_call.1} parent=1 // pred_region
      %539 = dma.done [#allocation5], 256
    $region37: #{tpu_custom_call.1} parent=1 // pred_fallthru
      _
    %540 = vsyncpa [#allocation5], 1

</llo_original>
